<compile_context>
chip_gen: v5e
topology: v5e:2x2
jax: 0.10.0
libtpu: 0.0.40
codegen_flags: <defaults>
</compile_context>

<pallas_src>
import functools

import jax
import jax.numpy as jnp
from jax import lax
from jax.experimental import pallas as pl
from jax.experimental.pallas import tpu as pltpu


_MASK_DTYPE = jnp.bfloat16  # attention masks are 0/1 -> exactly representable in bf16


def _mean_pool_kernel(*refs, true_s, block_s, chunk, needs_tail, masked):
    # masked:   refs = (x_ref [Bt,St,H], m_ref [Bt,St,1], out_ref [Bt,H], sum_acc, cnt_acc)
    # unmasked: refs = (x_ref [Bt,St,H], out_ref [Bt,H], sum_acc)
    if masked:
        x_ref, m_ref, out_ref, sum_acc, cnt_acc = refs
    else:
        x_ref, out_ref, sum_acc = refs
        m_ref = cnt_acc = None

    j = pl.program_id(1)

    @pl.when(j == 0)
    def _init():
        sum_acc[...] = jnp.zeros_like(sum_acc)
        if masked:
            cnt_acc[...] = jnp.zeros_like(cnt_acc)

    def accum(start, size):
        xs = x_ref[:, pl.ds(start, size), :].astype(jnp.float32)       # [Bt, size, H]
        if masked:
            ms = m_ref[:, pl.ds(start, size), :].astype(jnp.float32)   # [Bt, size, 1]
            contrib = xs * ms
        else:
            ms = None
            contrib = xs
        if needs_tail:
            # Last seq block overhangs S: its contents are uninitialised (possibly
            # NaN/Inf).  Select the tail away instead of relying on a zero mask.
            pos = (j * block_s + start
                   + lax.broadcasted_iota(jnp.int32, (1, size, 1), 1))
            valid = pos < true_s
            contrib = jnp.where(valid, contrib, 0.0)
            if masked:
                ms = jnp.where(valid, ms, 0.0)
        sum_acc[...] += jnp.sum(contrib, axis=1)                       # [Bt, H]
        if masked:
            cnt_acc[...] += jnp.sum(ms, axis=1)                        # [Bt, 1]

    # Sub-chunk loop keeps the f32 element-wise temporaries chunk-sized, not block-sized.
    n_full = block_s // chunk
    rem = block_s - n_full * chunk
    if n_full == 1:
        accum(0, chunk)
    elif n_full > 1:
        def body(c, carry):
            accum(pl.multiple_of(c * chunk, chunk), chunk)
            return carry
        lax.fori_loop(0, n_full, body, 0, unroll=True)
    if rem:
        accum(n_full * chunk, rem)          # static ragged tail of the block

    @pl.when(j == pl.num_programs(1) - 1)
    def _finalize():
        if masked:
            cnt = jnp.maximum(cnt_acc[...], jnp.float32(1e-9))   # torch.clamp(min=1e-9)
            out_ref[...] = (sum_acc[...] / cnt).astype(out_ref.dtype)
        else:
            out_ref[...] = (sum_acc[...] / jnp.float32(true_s)).astype(out_ref.dtype)


def _vmem_limit_bytes():
    cap = 64 * 1024 * 1024  # conservative default (v7x per-TensorCore VMEM)
    try:
        info = pltpu.get_tpu_info()
        cap = int(getattr(info, "vmem_capacity_bytes", cap) or cap)
    except Exception:
        pass
    # Leave headroom for Mosaic-internal scratch; never request more than 112 MiB.
    return max(32 * 1024 * 1024, min(cap - 16 * 1024 * 1024, 112 * 1024 * 1024))


def _choose_chunk(block_b, h):
    # Keep each f32 element-wise temporary (block_b, chunk, H) around <= 4 MiB.
    target = (4 << 20) // max(1, block_b * h * 4)
    return max(32, min(512, (target // 32) * 32))   # multiple of 32: f32/bf16/int8 packing


def _choose_block_s(seq, block_b, h, x_itemsize, mask_itemsize, chunk, budget):
    """Largest seq tile (multiple of `chunk`, capped at 8*chunk) whose double-buffered
    x block, lane-padded mask block and chunk-sized f32 temporaries fit in `budget`."""
    per_s = 2 * block_b * h * x_itemsize                 # x double-buffer
    if mask_itemsize:
        per_s += 2 * block_b * 128 * mask_itemsize       # (Bt, St, 1) pads to 128 lanes
    temps = 2 * block_b * chunk * h * 4                  # f32 upcast + product
    if mask_itemsize:
        temps += 2 * block_b * chunk * 128 * 4           # f32 mask upcast + masked copy
    fixed = temps + (2 << 20)                            # accs / out / misc slack
    max_s = max(chunk, (budget - fixed) // max(per_s, 1))
    cap = 8 * chunk                                      # keeps the unrolled inner loop short
    if max_s >= seq and seq <= cap:
        return seq                                       # one exact seq block, no tail
    return max(chunk, (min(max_s, cap, seq) // chunk) * chunk)


def mean_pooling(last_hidden_state, attention_mask=None):
    """last_hidden_state: [B, S, H]; attention_mask: [B, S] or None. Returns [B, H]."""
    x = last_hidden_state
    B, S, H = x.shape
    x_itemsize = jnp.dtype(x.dtype).itemsize
    masked = attention_mask is not None

    # Batch tile: full B when small; otherwise 16 for packed (sub-32-bit) outputs, else 8.
    block_b_target = 16 if x_itemsize < 4 else 8
    block_b = B if B <= block_b_target else block_b_target
    # TODO(synk): for B <= block_b on v7x (2 TensorCores) split the seq axis into two
    # parallel grid rows and combine the partial (sum, count) in the wrapper so both
    # cores get work.

    chunk = _choose_chunk(block_b, H)
    vmem_limit = _vmem_limit_bytes()
    mask_itemsize = jnp.dtype(_MASK_DTYPE).itemsize if masked else 0
    block_s = _choose_block_s(S, block_b, H, x_itemsize, mask_itemsize, chunk,
                              budget=vmem_limit - (8 << 20))
    needs_tail = (S % block_s) != 0

    grid = (pl.cdiv(B, block_b), pl.cdiv(S, block_s))

    kernel = functools.partial(
        _mean_pool_kernel, true_s=S, block_s=block_s, chunk=chunk,
        needs_tail=needs_tail, masked=masked)

    in_specs = [pl.BlockSpec((block_b, block_s, H), lambda i, j: (i, j, 0))]
    scratch = [pltpu.VMEM((block_b, H), jnp.float32)]     # running masked sum
    operands = [x]
    if masked:
        # bf16 mask keeps the 128-lane-padded VMEM tiles small; 0/1 masks are exact in bf16.
        mask3 = attention_mask.astype(_MASK_DTYPE).reshape(B, S, 1)
        in_specs.append(pl.BlockSpec((block_b, block_s, 1), lambda i, j: (i, j, 0)))
        scratch.append(pltpu.VMEM((block_b, 1), jnp.float32))   # running mask count
        operands.append(mask3)

    return pl.pallas_call(
        kernel,
        out_shape=jax.ShapeDtypeStruct((B, H), x.dtype),
        grid_spec=pltpu.PrefetchScalarGridSpec(
            num_scalar_prefetch=0,
            grid=grid,
            in_specs=in_specs,
            out_specs=pl.BlockSpec((block_b, H), lambda i, j: (i, 0)),
            scratch_shapes=scratch,
        ),
        compiler_params=pltpu.CompilerParams(
            dimension_semantics=("parallel", "arbitrary"),
            vmem_limit_bytes=vmem_limit,
        ),
    )(*operands)


def _reference(last_hidden_state, attention_mask=None):
    if attention_mask is None:
        return jnp.mean(last_hidden_state, axis=1)
    m = attention_mask[:, :, None].astype(jnp.float32)
    s = jnp.sum(last_hidden_state * m, axis=1)
    c = jnp.maximum(jnp.sum(m, axis=1), 1e-9)
    return s / c


if __name__ == "__main__":
    key = jax.random.PRNGKey(0)
    k1, k2, k3 = jax.random.split(key, 3)

    # --- small shapes consistent with the module: batch=2, seq=8, hidden=32 ---
    B, S, H = 2, 8, 32
    last_hidden_state = jax.random.normal(k1, (B, S, H), dtype=jnp.float32)
    attention_mask = jnp.ones((B, S), dtype=jnp.float32).at[1, -3:].set(0.0)

    out = jax.block_until_ready(mean_pooling(last_hidden_state, attention_mask))
    ref = _reference(last_hidden_state, attention_mask)
    assert out.shape == (B, H)
    assert jnp.allclose(out, ref, atol=1e-5, rtol=1e-5), (
        f"masked: max err {jnp.max(jnp.abs(out - ref))}")

    # no-mask fast path (plain mean over seq)
    out2 = jax.block_until_ready(mean_pooling(last_hidden_state, None))
    ref2 = _reference(last_hidden_state, None)
    assert jnp.allclose(out2, ref2, atol=1e-5, rtol=1e-5), (
        f"unmasked: max err {jnp.max(jnp.abs(out2 - ref2))}")

    # non-tile-aligned batch: exercises the cdiv edge block (no jnp.pad of x)
    B3, S3, H3 = 11, 128, 64
    x3 = jax.random.normal(k2, (B3, S3, H3), dtype=jnp.float32)
    m3 = (jax.random.uniform(k3, (B3, S3)) > 0.3).astype(jnp.float32)
    m3 = m3.at[:, 0].set(1.0)  # keep every row non-empty
    out3 = jax.block_until_ready(mean_pooling(x3, m3))
    ref3 = _reference(x3, m3)
    assert out3.shape == (B3, H3)
    assert jnp.allclose(out3, ref3, atol=1e-5, rtol=1e-5), (
        f"edge-block: max err {jnp.max(jnp.abs(out3 - ref3))}")

    print("KERNEL_OK")
</pallas_src>

<mosaic_0001>
module attributes {stable_mosaic.version = 11 : i64} {
  func.func @_mean_pool_kernel(%arg0: i32, %arg1: i32, %arg2: memref<2x8x32xf32, #tpu.memory_space<vmem>>, %arg3: memref<2x8x1xbf16, #tpu.memory_space<vmem>>, %arg4: memref<2x32xf32, #tpu.memory_space<vmem>>, %arg5: memref<2x32xf32, #tpu.memory_space<vmem>>, %arg6: memref<2x1xf32, #tpu.memory_space<vmem>>) attributes {dimension_semantics = [#tpu.dimension_semantics<parallel>, #tpu.dimension_semantics<arbitrary>], iteration_bounds = array<i64: 1, 1>, scalar_prefetch = 0 : i64, scratch_operands = 2 : i64, tpu.core_type = #tpu.core_type<tc>, window_params = [{transform_indices = @transform_0, window_bounds = array<i64: 2, 8, 32>}, {transform_indices = @transform_1, window_bounds = array<i64: 2, 8, 1>}, {transform_indices = @transform_2, window_bounds = array<i64: 2, 32>}]} {
    %c0_i32 = arith.constant 0 : i32
    %0 = arith.cmpi eq, %arg1, %c0_i32 : i32
    %1 = arith.extui %0 : i1 to i32
    %c0_i32_0 = arith.constant 0 : i32
    %2 = arith.cmpi ne, %1, %c0_i32_0 : i32
    scf.if %2 {
      %cst_17 = arith.constant 0.000000e+00 : f32
      %19 = vector.broadcast %cst_17 : f32 to vector<2x32xf32>
      %c0_18 = arith.constant 0 : index
      %c0_19 = arith.constant 0 : index
      %20 = vector.load %arg5[%c0_18, %c0_19] : memref<2x32xf32, #tpu.memory_space<vmem>>, vector<2x32xf32>
      tpu.vector_store %arg5[%c0_18, %c0_19], %19 {strides = array<i32>} : memref<2x32xf32, #tpu.memory_space<vmem>>, vector<2x32xf32>,
      %cst_20 = arith.constant 0.000000e+00 : f32
      %21 = vector.broadcast %cst_20 : f32 to vector<2x1xf32>
      %c0_21 = arith.constant 0 : index
      %c0_22 = arith.constant 0 : index
      %22 = vector.load %arg6[%c0_21, %c0_22] : memref<2x1xf32, #tpu.memory_space<vmem>>, vector<2x1xf32>
      tpu.vector_store %arg6[%c0_21, %c0_22], %21 {strides = array<i32>} : memref<2x1xf32, #tpu.memory_space<vmem>>, vector<2x1xf32>,
    } else {
    }
    %c0 = arith.constant 0 : index
    %c0_1 = arith.constant 0 : index
    %c0_2 = arith.constant 0 : index
    %3 = vector.load %arg2[%c0, %c0_1, %c0_2] : memref<2x8x32xf32, #tpu.memory_space<vmem>>, vector<2x8x32xf32>
    %c0_3 = arith.constant 0 : index
    %c0_4 = arith.constant 0 : index
    %c0_5 = arith.constant 0 : index
    %4 = vector.load %arg3[%c0_3, %c0_4, %c0_5] : memref<2x8x1xbf16, #tpu.memory_space<vmem>>, vector<2x8x1xbf16>
    %5 = arith.extf %4 : vector<2x8x1xbf16> to vector<2x8x1xf32>
    %6 = vector.broadcast %5 : vector<2x8x1xf32> to vector<2x8x32xf32>
    %7 = arith.mulf %3, %6 : vector<2x8x32xf32>
    %c0_6 = arith.constant 0 : index
    %c0_7 = arith.constant 0 : index
    %8 = vector.load %arg5[%c0_6, %c0_7] : memref<2x32xf32, #tpu.memory_space<vmem>>, vector<2x32xf32>
    %cst = arith.constant dense<0.000000e+00> : vector<2x32xf32>
    %9 = vector.multi_reduction <add>, %7, %cst [1] : vector<2x8x32xf32> to vector<2x32xf32>
    %10 = arith.addf %8, %9 : vector<2x32xf32>
    %c0_8 = arith.constant 0 : index
    %c0_9 = arith.constant 0 : index
    %11 = vector.load %arg5[%c0_8, %c0_9] : memref<2x32xf32, #tpu.memory_space<vmem>>, vector<2x32xf32>
    tpu.vector_store %arg5[%c0_8, %c0_9], %10 {strides = array<i32>} : memref<2x32xf32, #tpu.memory_space<vmem>>, vector<2x32xf32>,
    %c0_10 = arith.constant 0 : index
    %c0_11 = arith.constant 0 : index
    %12 = vector.load %arg6[%c0_10, %c0_11] : memref<2x1xf32, #tpu.memory_space<vmem>>, vector<2x1xf32>
    %cst_12 = arith.constant dense<0.000000e+00> : vector<2x1xf32>
    %13 = vector.multi_reduction <add>, %5, %cst_12 [1] : vector<2x8x1xf32> to vector<2x1xf32>
    %14 = arith.addf %12, %13 : vector<2x1xf32>
    %c0_13 = arith.constant 0 : index
    %c0_14 = arith.constant 0 : index
    %15 = vector.load %arg6[%c0_13, %c0_14] : memref<2x1xf32, #tpu.memory_space<vmem>>, vector<2x1xf32>
    tpu.vector_store %arg6[%c0_13, %c0_14], %14 {strides = array<i32>} : memref<2x1xf32, #tpu.memory_space<vmem>>, vector<2x1xf32>,
    %c0_i32_15 = arith.constant 0 : i32
    %16 = arith.cmpi eq, %arg1, %c0_i32_15 : i32
    %17 = arith.extui %16 : i1 to i32
    %c0_i32_16 = arith.constant 0 : i32
    %18 = arith.cmpi ne, %17, %c0_i32_16 : i32
    scf.if %18 {
      %c0_17 = arith.constant 0 : index
      %c0_18 = arith.constant 0 : index
      %19 = vector.load %arg6[%c0_17, %c0_18] : memref<2x1xf32, #tpu.memory_space<vmem>>, vector<2x1xf32>
      %cst_19 = arith.constant 9.99999971E-10 : f32
      %20 = vector.broadcast %cst_19 : f32 to vector<2x1xf32>
      %21 = arith.maximumf %19, %20 : vector<2x1xf32>
      %c0_20 = arith.constant 0 : index
      %c0_21 = arith.constant 0 : index
      %22 = vector.load %arg5[%c0_20, %c0_21] : memref<2x32xf32, #tpu.memory_space<vmem>>, vector<2x32xf32>
      %23 = vector.broadcast %21 : vector<2x1xf32> to vector<2x32xf32>
      %24 = arith.divf %22, %23 : vector<2x32xf32>
      %c0_22 = arith.constant 0 : index
      %c0_23 = arith.constant 0 : index
      %25 = vector.load %arg4[%c0_22, %c0_23] : memref<2x32xf32, #tpu.memory_space<vmem>>, vector<2x32xf32>
      tpu.vector_store %arg4[%c0_22, %c0_23], %24 {strides = array<i32>} : memref<2x32xf32, #tpu.memory_space<vmem>>, vector<2x32xf32>,
    } else {
    }
    return
  }
  func.func @transform_0(%arg0: i32, %arg1: i32) -> (i32, i32, i32) {
    %c0_i32 = arith.constant 0 : i32
    %c0_i32_0 = arith.constant 0 : i32
    return %arg0, %arg1, %c0_i32 : i32, i32, i32
  }
  func.func @transform_1(%arg0: i32, %arg1: i32) -> (i32, i32, i32) {
    %c0_i32 = arith.constant 0 : i32
    %c0_i32_0 = arith.constant 0 : i32
    return %arg0, %arg1, %c0_i32 : i32, i32, i32
  }
  func.func @transform_2(%arg0: i32, %arg1: i32) -> (i32, i32) {
    %c0_i32 = arith.constant 0 : i32
    %c0_i32_0 = arith.constant 0 : i32
    return %arg0, %c0_i32 : i32, i32
  }
}

</mosaic_0001>

<llo_original>
// kernel: tpu_custom_call.1
$region0: #{tpu_custom_call.1}
  #allocation0 [shape = 'u32[]', space=smem, size = 0x4, offset = 0x4, fixed_abs, tag = 'smem constant byte address 0x4 - core index']
  #allocation1 [shape = 'u32[72,128]{1,0:T(1,128)}', space=vmem, size = 0x9000, scoped, tag = 'internal scratch']
  #allocation2 [shape = 'f32[2,32]{1,0:T(2,128)}', space=vmem, size = 0x400, scoped, tag = 'scratch operand']
  #allocation3 [shape = 'f32[2,1]{1,0:T(2,128)}', space=vmem, size = 0x400, scoped, tag = 'scratch operand']
  %s0 = inlined_call_operand.hbm [shape: f32[2,8,32], index: 0, kind: input, shape index: {}]
  %s1 = inlined_call_operand.vmem [shape: bf16[2,8,1], index: 1, kind: input, shape index: {}]
  %s2 = inlined_call_operand.hbm [shape: f32[2,32], index: 2, kind: output, shape index: {}]
  %s3 = sld [smem:[#allocation0]]
  $region30: #{tpu_custom_call.1} parent=0
    _
  %s5 = ssub.s32 1, %s3
  %s6 = scalar_select 0, %s5, %s3
  $region1: #{tpu_custom_call.1} parent=0
    #allocation4 [shape = 'u8[8192]{0}', space=vmem, size = 0x2000, scoped, tag = 'input window, operand 0, single buffered']
    #allocation5 [shape = 's32[1]{0}', space=sflag, size = 0x4, scoped, tag = 'scoped memory for tpu_custom_call.1']
    #allocation6 [shape = 's32[1]{0}', space=sflag, size = 0x4, scoped, tag = 'scoped memory for tpu_custom_call.1']
    #allocation7 [shape = 'u8[1024]{0}', space=vmem, size = 0x400, scoped, tag = 'output window, operand 0, single buffered']
    %7 = vsyncpa [#allocation5], 0
    %8 = vsyncpa [#allocation6], 0
    // Predicated region
    $region2: #{tpu_custom_call.1} parent=1 // pred_check
      _
    $region3: #{tpu_custom_call.1} parent=1 // pred_check_branch
      %10 = sbr.rel (0) target = $region5
    $region4: #{tpu_custom_call.1} parent=1 // pred_region
      %12 = vsyncadd [#allocation5], 0
      %s13 = sshll.u32 %s0, 4
      %s14 = int_to_ptr.hbm [resolvable:$true] %s13
      %s15 = sshll.u32 [#allocation4], 4
      %s16 = int_to_ptr.vmem [resolvable:$true] %s15
      %21 = dma.hbm_to_vmem [thread:$0]  %s14, 256, %s16, [#allocation5], 128, 128, 8
    $region5: #{tpu_custom_call.1} parent=1 // pred_fallthru
      _
    // Predicated region
    $region6: #{tpu_custom_call.1} parent=1 // pred_check
      _
    $region7: #{tpu_custom_call.1} parent=1 // pred_check_branch
      %23 = sbr.rel (0) target = $region9
    $region8: #{tpu_custom_call.1} parent=1 // pred_region
      _
    $region9: #{tpu_custom_call.1} parent=1 // pred_fallthru
      _
    // Predicated region
    $region10: #{tpu_custom_call.1} parent=1 // pred_check
      _
    $region11: #{tpu_custom_call.1} parent=1 // pred_check_branch
      %25 = sbr.rel (0) target = $region13
    $region12: #{tpu_custom_call.1} parent=1 // pred_region
      %27 = dma.done [#allocation5], 256
    $region13: #{tpu_custom_call.1} parent=1 // pred_fallthru
      _
    %p28 = scmp.eq.s32.totalorder 0, 0
    // Predicated region
    $region14: #{tpu_custom_call.1} parent=1 // pred_check
      %p29 = pneg %p28
    $region15: #{tpu_custom_call.1} parent=1 // pred_check_branch
      %31 = sbr.rel (%p29) target = $region17
    $region16: #{tpu_custom_call.1} parent=1 // pred_region
      %vm32 = vcmask 254976
      %33 = vst.msk [vmem:[#allocation2] sm:$0x3] %vm32, 0.0
      %vm34 = vcmask 1024
      %35 = vst.msk [vmem:[#allocation3] sm:$0x3] %vm34, 0.0
    $region17: #{tpu_custom_call.1} parent=1 // pred_fallthru
      _
    %v36 = vld [vmem:[#allocation4] sm:$0xff]
    %v37 = vld [vmem:[#allocation4 + $0x8] sm:$0xff]
    %v38 = vld [vmem:[%s1] sm:$0xf]
    %v39 = vld [vmem:[%s1 + $0x4] sm:$0xf]
    %v40 = vunpack.c.l.bf16 %v38
    %v41 = vunpack.c.l.bf16 %v39
    %43 = vset.pattern.permute.xlu0 0
    %44 = vperm.xlu0 %43, %v40
    %v45 = vpop.permute.xlu0 %44
    %48 = vset.pattern.permute.xlu0 0
    %49 = vperm.xlu0 %48, %v41
    %v50 = vpop.permute.xlu0 %49
    %v52 = vmul.f32 %v36, %v45
    %v53 = vmul.f32 %v37, %v50
    %v54 = vld [vmem:[#allocation2] sm:$0x3]
    %vm55 = vcmask 261120
    %v56 = vsel %vm55, %v52, 0.0
    %v57 = vrot.slane %v56, 4
    %v58 = vadd.f32 %v56, %v57
    %v59 = vrot.slane %v58, 2
    %v60 = vadd.f32 %v58, %v59
    %v61 = vrot.slane %v60, 1
    %v62 = vadd.f32 %v60, %v61
    %v63 = vsel %vm55, %v53, 0.0
    %v64 = vrot.slane %v63, 4
    %v65 = vadd.f32 %v63, %v64
    %v66 = vrot.slane %v65, 2
    %v67 = vadd.f32 %v65, %v66
    %v68 = vrot.slane %v67, 1
    %v69 = vadd.f32 %v67, %v68
    %vm72 = vcmask 1041409
    %v73 = vsel %vm72, %v69, %v62
    %v75 = vadd.f32 %v54, %v73
    %vm76 = vcmask 254976
    %77 = vst.msk [vmem:[#allocation2] sm:$0x3] %vm76, %v75
    %v78 = vld [vmem:[#allocation3] sm:$0x3]
    %vm79 = vcmask 7168
    %v80 = vsel %vm79, %v40, 0.0
    %v81 = vrot.slane %v80, 4
    %v82 = vadd.f32 %v80, %v81
    %v83 = vrot.slane %v82, 2
    %v84 = vadd.f32 %v82, %v83
    %v85 = vrot.slane %v84, 1
    %v86 = vadd.f32 %v84, %v85
    %v87 = vsel %vm79, %v41, 0.0
    %v88 = vrot.slane %v87, 4
    %v89 = vadd.f32 %v87, %v88
    %v90 = vrot.slane %v89, 2
    %v91 = vadd.f32 %v89, %v90
    %v92 = vrot.slane %v91, 1
    %v93 = vadd.f32 %v91, %v92
    %v96 = vsel %vm72, %v93, %v86
    %v98 = vadd.f32 %v78, %v96
    %vm99 = vcmask 1024
    %100 = vst.msk [vmem:[#allocation3] sm:$0x3] %vm99, %v98
    // Predicated region
    $region18: #{tpu_custom_call.1} parent=1 // pred_check
      %p101 = pneg %p28
    $region19: #{tpu_custom_call.1} parent=1 // pred_check_branch
      %103 = sbr.rel (%p101) target = $region21
    $region20: #{tpu_custom_call.1} parent=1 // pred_region
      %v104 = vld [vmem:[#allocation3] sm:$0x3]
      %v105 = vmax.f32 %v104, 1e-09
      %v106 = vld [vmem:[#allocation2] sm:$0x3]
      %108 = vset.pattern.permute.xlu0 0
      %109 = vperm.xlu0 %108, %v105
      %v110 = vpop.permute.xlu0 %109
      %v112 = vrcp.pop %v110
      %v113 = vmul.f32 %v110, %v112
      %v114 = vsub.f32 1.0, %v113
      %v115 = vmul.f32 %v112, %v114
      %v116 = vadd.f32 %v112, %v115
      %vm117 = vweird.f32 %v110
      %vm118 = vweird.f32 %v112
      %vm119 = vmor %vm117, %vm118
      %v120 = vsel %vm119, %v112, %v116
      %v121 = vand.u32 2147483647, %v110
      %vm122 = vcmp.eq.f32.partialorder %v121, 8.507059e+37
      %v123 = vand.u32 %v110, 2147483648
      %v124 = vor.u32 1.1754944e-38, %v123
      %v125 = vsel %vm122, %v124, %v120
      %v126 = vmul.f32 %v106, %v125
      %127 = vst.msk [vmem:[#allocation7] sm:$0x3] %vm76, %v126
    $region21: #{tpu_custom_call.1} parent=1 // pred_fallthru
      _
    // Predicated region
    $region22: #{tpu_custom_call.1} parent=1 // pred_check
      _
    $region23: #{tpu_custom_call.1} parent=1 // pred_check_branch
      %129 = sbr.rel (0) target = $region25
    $region24: #{tpu_custom_call.1} parent=1 // pred_region
      %131 = vsyncadd [#allocation6], 0
      %s133 = sshll.u32 [#allocation7], 4
      %s134 = int_to_ptr.vmem [resolvable:$true] %s133
      %s135 = sshll.u32 %s2, 4
      %s136 = int_to_ptr.hbm [resolvable:$true] %s135
      %138 = dma.vmem_to_hbm [thread:$0]  %s134, 32, %s136, [#allocation6]
    $region25: #{tpu_custom_call.1} parent=1 // pred_fallthru
      _
    // Predicated region
    $region26: #{tpu_custom_call.1} parent=1 // pred_check
      _
    $region27: #{tpu_custom_call.1} parent=1 // pred_check_branch
      %140 = sbr.rel (0) target = $region29
    $region28: #{tpu_custom_call.1} parent=1 // pred_region
      %142 = dma.done [#allocation6], 32
    $region29: #{tpu_custom_call.1} parent=1 // pred_fallthru
      _
    %143 = vsyncpa [#allocation5], 1
    %144 = vsyncpa [#allocation6], 1

</llo_original>
